<compile_context>
chip_gen: v7x
topology: tpu7x:2x2x1
jax: 0.10.0
libtpu: 0.0.40
codegen_flags: <defaults>
</compile_context>

<pallas_src>
import math
from functools import partial

import jax
import jax.numpy as jnp
import numpy as np
from jax.experimental import pallas as pl
from jax.experimental.pallas import tpu as pltpu

# ----- "GemmaConfig" (small, deterministic) -----
HIDDEN_SIZE = 32
NUM_HEADS = 4
NUM_KV_HEADS = 2
HEAD_DIM = 16
ROPE_BASE = 10000.0
ATTENTION_BIAS = False  # Gemma default


# --------------------------------------------------------------------------------------
# UnpaddedGemmaRotaryEmbedding: __init__ builds cos/sin caches, forward() returns them.
# --------------------------------------------------------------------------------------
def gemma_rotary_embedding(dim, max_position_embeddings, base=ROPE_BASE):
    inv_freq = 1.0 / base ** (jnp.arange(0, dim, 2, dtype=jnp.float32) / dim)
    t = jnp.arange(max_position_embeddings, dtype=jnp.float32)
    freqs = jnp.outer(t, inv_freq)
    emb = jnp.concatenate([freqs, freqs], axis=-1)
    return jnp.cos(emb), jnp.sin(emb)   # == module.forward()


def _rotate_half_matrix(dim):
    """d x d signed permutation P with t @ P == rotate_half(t) == cat(-t[d/2:], t[:d/2])."""
    half = dim // 2
    p = np.zeros((dim, dim), np.float32)
    p[np.arange(half) + half, np.arange(half)] = -1.0   # out[:half] = -in[half:]
    p[np.arange(half), np.arange(half) + half] = 1.0    # out[half:] =  in[:half]
    return p


# --------------------------------------------------------------------------------------
# Prologue: project K/V and apply RoPE to K once (streamed over row blocks).
# --------------------------------------------------------------------------------------
def _kv_rope_kernel(x_ref, wkv_ref, csk_ref, kv_ref, *, fk):
    kk = jnp.dot(x_ref[...], wkv_ref[...], preferred_element_type=jnp.float32)  # [b, 3*fk]
    kr = kk[:, :2 * fk] * csk_ref[...].astype(jnp.float32)                      # [cos|sin]
    k = kr[:, :fk] + kr[:, fk:]                                                  # rotated K
    v = kk[:, 2 * fk:]
    kv_ref[...] = jnp.concatenate([k, v], axis=-1).astype(jnp.bfloat16)          # [b, 2*fk]


# --------------------------------------------------------------------------------------
# Flash-style attention kernel (Q proj+RoPE at ki==0, online softmax, output proj)
# --------------------------------------------------------------------------------------
def _flash_attn_kernel(maxend_ref,
                       xq_ref, wq_ref, csq_ref, kv_ref, seqend_ref, wo_ref,
                       out_ref,
                       q_sc, acc_sc, m_sc, l_sc, rowq_sc,
                       *, num_heads, num_kv_heads, head_dim, block_q, block_k):
    qi = pl.program_id(0)
    ki = pl.program_id(1)
    nk = pl.num_programs(1)
    fq = num_heads * head_dim
    fk = num_kv_heads * head_dim
    group = num_heads // num_kv_heads

    @pl.when(ki == 0)
    def _init():
        # Q projection + RoPE hoisted out of the key loop (rotate_half & 1/sqrt(d)
        # are folded into wq_cat; csq holds [cos_rep | sin_rep] in bf16).
        qq = jnp.dot(xq_ref[...], wq_ref[...],
                     preferred_element_type=jnp.float32)                 # [bq, 2*fq]
        qq = qq * csq_ref[...].astype(jnp.float32)
        q_sc[...] = (qq[:, :fq] + qq[:, fq:]).astype(jnp.bfloat16)       # [bq, fq]
        rowq_sc[...] = (jax.lax.broadcasted_iota(jnp.int32, (block_q, 1), 0)
                        + qi * block_q)                                  # global row ids
        m_sc[...] = jnp.full(m_sc.shape, -jnp.inf, dtype=jnp.float32)
        l_sc[...] = jnp.zeros(l_sc.shape, dtype=jnp.float32)
        acc_sc[...] = jnp.zeros(acc_sc.shape, dtype=jnp.float32)

    # Block skip: key block entirely above the causal diagonal, or every key's sequence
    # ends before this query block starts (scalar-prefetched per-key-block max seq_end).
    q_lo = qi * block_q
    q_end = q_lo + block_q - 1
    k_lo = ki * block_k
    needed = jnp.logical_and(k_lo <= q_end, maxend_ref[ki] >= q_lo)

    @pl.when(needed)
    def _compute():
        kv = kv_ref[...]                               # bf16 [bk, 2*fk] (pre-projected)
        k = kv[:, :fk]
        v = kv[:, fk:]
        q = q_sc[...]                                  # bf16 [bq, fq]

        # varlen-causal mask: allowed(r, c) = (c <= r) & (r <= seq_end[c])
        row = rowq_sc[...]                                               # [bq, 1] i32
        col = (jax.lax.broadcasted_iota(jnp.int32, (block_q, block_k), 1) + k_lo)
        seq_end = seqend_ref[0]                                          # [1, bk] i32
        allowed = jnp.logical_and(col <= row, row <= seq_end)

        m_prev = m_sc[...]                                               # [bq, nH]
        m_new_cols, psum_cols, p_list = [], [], []
        for h in range(num_heads):
            kvh = h // group
            q_h = q[:, h * head_dim:(h + 1) * head_dim]
            k_h = k[:, kvh * head_dim:(kvh + 1) * head_dim]
            s = jax.lax.dot_general(q_h, k_h, (((1,), (1,)), ((), ())),
                                    preferred_element_type=jnp.float32)  # [bq, bk]
            s = jnp.where(allowed, s, jnp.float32(-1e30))
            m_new_h = jnp.maximum(m_prev[:, h:h + 1],
                                  jnp.max(s, axis=-1, keepdims=True))
            # Explicitly zero masked probabilities (robust for fully-masked rows).
            p = jnp.where(allowed, jnp.exp(s - m_new_h), 0.0)
            m_new_cols.append(m_new_h)
            psum_cols.append(jnp.sum(p, axis=-1, keepdims=True))
            p_list.append(p.astype(jnp.bfloat16))

        m_new = jnp.concatenate(m_new_cols, axis=1)                      # [bq, nH]
        alpha = jnp.exp(m_prev - m_new)                                  # [bq, nH]
        l_sc[...] = alpha * l_sc[...] + jnp.concatenate(psum_cols, axis=1)
        m_sc[...] = m_new

        pv = jnp.concatenate(
            [jnp.dot(p_list[h],
                     v[:, (h // group) * head_dim:((h // group) + 1) * head_dim],
                     preferred_element_type=jnp.float32)
             for h in range(num_heads)], axis=1)                         # [bq, fq]
        alpha_w = jnp.concatenate(
            [jnp.broadcast_to(alpha[:, h:h + 1], (block_q, head_dim))
             for h in range(num_heads)], axis=1)                         # [bq, fq]
        acc_sc[...] = alpha_w * acc_sc[...] + pv                         # full-width VPU

    @pl.when(ki == nk - 1)
    def _finalize():
        inv_l = pl.reciprocal(l_sc[...], approx=True)                    # [bq, nH]
        inv_w = jnp.concatenate(
            [jnp.broadcast_to(inv_l[:, h:h + 1], (block_q, head_dim))
             for h in range(num_heads)], axis=1)                         # [bq, fq]
        o = (acc_sc[...] * inv_w).astype(jnp.bfloat16)                   # [bq, fq]
        out_ref[...] = jnp.dot(o, wo_ref[...],
                               preferred_element_type=jnp.float32)       # single matmul


# --------------------------------------------------------------------------------------
# Wrapper mirroring UnpaddedGemmaAttention.forward (consumer of the rotary module)
# --------------------------------------------------------------------------------------
def unpadded_gemma_attention(cos_sin, nz_hidden_states, nz_position_ids,
                             cu_seqlens, max_seqlen, params, *, block=512):
    """block: query/key tile size.  VMEM is not binding at these widths, so ~512 is a
    good default on v5e/v6e/v7x; for v7x keep nq >= 2 (even) so both TCs get work."""
    del max_seqlen
    cos, sin = cos_sin
    T, H = nz_hidden_states.shape
    d, nH, nKV = HEAD_DIM, NUM_HEADS, NUM_KV_HEADS
    fq, fk = nH * d, nKV * d

    nq = -(-T // block)
    T_pad = nq * block
    nk = nq

    # --- one-time weight prep: fold rotate_half and 1/sqrt(d) into the projections -----
    r_q = jnp.asarray(np.kron(np.eye(nH, dtype=np.float32), _rotate_half_matrix(d)))
    r_k = jnp.asarray(np.kron(np.eye(nKV, dtype=np.float32), _rotate_half_matrix(d)))
    scale = 1.0 / math.sqrt(d)
    wq_cat = jnp.concatenate(
        [params["wq"] * scale, (params["wq"] @ r_q) * scale], axis=1).astype(jnp.bfloat16)
    wkv_cat = jnp.concatenate(
        [params["wk"], params["wk"] @ r_k, params["wv"]], axis=1).astype(jnp.bfloat16)
    wo = params["wo"].astype(jnp.bfloat16)

    # --- per-token glue: gather rope rows, head-tile, pack [cos | sin] in bf16 ---------
    pos = nz_position_ids.astype(jnp.int32)
    cos_t = cos[pos].astype(jnp.float32)                                   # [T, d]
    sin_t = sin[pos].astype(jnp.float32)
    csq = jnp.concatenate([jnp.tile(cos_t, (1, nH)),
                           jnp.tile(sin_t, (1, nH))], -1).astype(jnp.bfloat16)   # [T, 2*fq]
    csk = jnp.concatenate([jnp.tile(cos_t, (1, nKV)),
                           jnp.tile(sin_t, (1, nKV))], -1).astype(jnp.bfloat16)  # [T, 2*fk]

    def pad_rows(a):
        p = T_pad - a.shape[0]
        return a if p == 0 else jnp.pad(a, ((0, p), (0, 0)))

    x_pad = pad_rows(nz_hidden_states.astype(jnp.bfloat16))
    csq_pad = pad_rows(csq)
    csk_pad = pad_rows(csk)

    # per-token sequence end (last index of the token's packed sequence); padded tokens
    # point at themselves so every row has at least one allowed key (no 0-denominator).
    seg = jnp.searchsorted(cu_seqlens, jnp.arange(T, dtype=jnp.int32), side="right") - 1
    seq_end_real = (cu_seqlens[seg + 1] - 1).astype(jnp.int32)             # [T]
    seq_end = jnp.concatenate(
        [seq_end_real, jnp.arange(T, T_pad, dtype=jnp.int32)])             # [T_pad]
    seq_end_blk = seq_end.reshape(nk, 1, block)                            # lane-dense
    maxend = jnp.max(seq_end.reshape(nk, block), axis=1).astype(jnp.int32)  # [nk] SMEM

    # --- prologue: K/V projection + K RoPE once, bf16 k|v slab in HBM ------------------
    kv_slab = pl.pallas_call(
        partial(_kv_rope_kernel, fk=fk),
        out_shape=jax.ShapeDtypeStruct((T_pad, 2 * fk), jnp.bfloat16),
        grid_spec=pltpu.PrefetchScalarGridSpec(
            num_scalar_prefetch=0, grid=(nk,),
            in_specs=[pl.BlockSpec((block, H), lambda i: (i, 0)),
                      pl.BlockSpec((H, 3 * fk), lambda i: (0, 0)),
                      pl.BlockSpec((block, 2 * fk), lambda i: (i, 0))],
            out_specs=pl.BlockSpec((block, 2 * fk), lambda i: (i, 0))),
        compiler_params=pltpu.CompilerParams(dimension_semantics=("parallel",)),
    )(x_pad, wkv_cat, csk_pad)

    # --- flash attention grid -----------------------------------------------------------
    kernel = partial(_flash_attn_kernel, num_heads=nH, num_kv_heads=nKV,
                     head_dim=d, block_q=block, block_k=block)

    grid_spec = pltpu.PrefetchScalarGridSpec(
        num_scalar_prefetch=1,
        grid=(nq, nk),
        in_specs=[
            pl.BlockSpec((block, H), lambda qi, ki, me: (qi, 0)),         # x (query rows)
            pl.BlockSpec((H, 2 * fq), lambda qi, ki, me: (0, 0)),         # [wq | wq@R] resident
            pl.BlockSpec((block, 2 * fq), lambda qi, ki, me: (qi, 0)),    # packed cos|sin (q)
            pl.BlockSpec((block, 2 * fk), lambda qi, ki, me: (ki, 0)),    # pre-projected k|v
            pl.BlockSpec((1, 1, block), lambda qi, ki, me: (ki, 0, 0)),   # per-key seq_end
            pl.BlockSpec((fq, H), lambda qi, ki, me: (0, 0)),             # wo resident
        ],
        out_specs=pl.BlockSpec((block, H), lambda qi, ki, me: (qi, 0)),
        scratch_shapes=[
            pltpu.VMEM((block, fq), jnp.bfloat16),   # q (proj + RoPE, hoisted)
            pltpu.VMEM((block, fq), jnp.float32),    # lane-packed accumulator
            pltpu.VMEM((block, nH), jnp.float32),    # running max (per head)
            pltpu.VMEM((block, nH), jnp.float32),    # running sum (per head)
            pltpu.VMEM((block, 1), jnp.int32),       # global query-row ids
        ],
    )

    out_pad = pl.pallas_call(
        kernel,
        out_shape=jax.ShapeDtypeStruct((T_pad, H), jnp.float32),
        grid_spec=grid_spec,
        compiler_params=pltpu.CompilerParams(
            dimension_semantics=("parallel", "arbitrary"),
            # Actual need is a few MiB; 32 MiB leaves headroom even on v7x (64 MiB/TC).
            vmem_limit_bytes=32 * 1024 * 1024),
    )(maxend, x_pad, wq_cat, csq_pad, kv_slab, seq_end_blk, wo)

    return out_pad[:T]


# ----- pure-JAX fp32 reference for verification -----
def ref_forward(cos_sin, x, position_ids, cu_seqlens, params):
    cos, sin = cos_sin
    T = x.shape[0]
    d = HEAD_DIM
    q = (x @ params["wq"]).reshape(T, NUM_HEADS, d)
    k = (x @ params["wk"]).reshape(T, NUM_KV_HEADS, d)
    v = (x @ params["wv"]).reshape(T, NUM_KV_HEADS, d)
    c = cos[position_ids][:, None, :]
    s = sin[position_ids][:, None, :]

    def rot(t):
        return jnp.concatenate([-t[..., d // 2:], t[..., : d // 2]], axis=-1)

    q = q * c + rot(q) * s
    k = k * c + rot(k) * s
    k = jnp.repeat(k, NUM_HEADS // NUM_KV_HEADS, axis=1)
    v = jnp.repeat(v, NUM_HEADS // NUM_KV_HEADS, axis=1)

    tok = jnp.arange(T)
    seg = jnp.searchsorted(cu_seqlens, tok, side="right") - 1
    allowed = (seg[:, None] == seg[None, :]) & (tok[:, None] >= tok[None, :])

    scores = jnp.einsum("ihd,jhd->hij", q, k) / math.sqrt(d)
    scores = jnp.where(allowed[None], scores, -jnp.inf)
    probs = jax.nn.softmax(scores, axis=-1)
    o = jnp.einsum("hij,jhd->ihd", probs, v).reshape(T, NUM_HEADS * d)
    return o @ params["wo"]


if __name__ == "__main__":
    key = jax.random.PRNGKey(0)
    k_x, k_q, k_k, k_v, k_o = jax.random.split(key, 5)

    # three packed sequences -> T = 64 tokens (exercises cross-sequence masking,
    # block skipping and fully-masked rows in the first computed key block).
    seqlens = [24, 20, 20]
    T = sum(seqlens)
    max_seqlen = max(seqlens)
    cu_seqlens = jnp.array(np.cumsum([0] + seqlens), dtype=jnp.int32)   # [0, 24, 44, 64]
    nz_position_ids = jnp.concatenate(
        [jnp.arange(l, dtype=jnp.int32) for l in seqlens])              # [T]

    nz_hidden_states = jax.random.normal(k_x, (T, HIDDEN_SIZE), jnp.float32)

    # deterministic parameters (stored [in, out] == torch weight.T); attention_bias=False
    params = {
        "wq": 0.05 * jax.random.normal(k_q, (HIDDEN_SIZE, NUM_HEADS * HEAD_DIM), jnp.float32),
        "wk": 0.05 * jax.random.normal(k_k, (HIDDEN_SIZE, NUM_KV_HEADS * HEAD_DIM), jnp.float32),
        "wv": 0.05 * jax.random.normal(k_v, (HIDDEN_SIZE, NUM_KV_HEADS * HEAD_DIM), jnp.float32),
        "wo": 0.05 * jax.random.normal(k_o, (NUM_HEADS * HEAD_DIM, HIDDEN_SIZE), jnp.float32),
    }

    # UnpaddedGemmaRotaryEmbedding.forward() -> (cos_cached, sin_cached)
    cos_sin = gemma_rotary_embedding(HEAD_DIM, max_seqlen, ROPE_BASE)

    expected = ref_forward(cos_sin, nz_hidden_states, nz_position_ids, cu_seqlens, params)

    # exercise both the single-tile path (block >= T) and the multi-tile path with
    # online softmax + block skipping (block=32 -> 2x2 grid, upper-right block skipped)
    for blk in (128, 32):
        out = unpadded_gemma_attention(cos_sin, nz_hidden_states, nz_position_ids,
                                       cu_seqlens, max_seqlen, params, block=blk)
        out = jax.block_until_ready(out)
        np.testing.assert_allclose(np.asarray(out), np.asarray(expected),
                                   rtol=2e-2, atol=2e-2)   # bf16 matmul operands

    print("KERNEL_OK")
</pallas_src>

<mosaic_0001>
module attributes {stable_mosaic.version = 11 : i64} {
  func.func @_kv_rope_kernel(%arg0: i32, %arg1: memref<128x32xbf16, #tpu.memory_space<vmem>>, %arg2: memref<32x96xbf16, #tpu.memory_space<vmem>>, %arg3: memref<128x64xbf16, #tpu.memory_space<vmem>>, %arg4: memref<128x64xbf16, #tpu.memory_space<vmem>>) attributes {dimension_semantics = [#tpu.dimension_semantics<parallel>], iteration_bounds = array<i64: 1>, scalar_prefetch = 0 : i64, scratch_operands = 0 : i64, tpu.core_type = #tpu.core_type<tc>, window_params = [{transform_indices = @transform_0, window_bounds = array<i64: 128, 32>}, {pipeline_mode = #tpu.pipeline_mode<synchronous>, transform_indices = @transform_1, window_bounds = array<i64: 32, 96>}, {transform_indices = @transform_2, window_bounds = array<i64: 128, 64>}, {transform_indices = @transform_3, window_bounds = array<i64: 128, 64>}]} {
    %c0 = arith.constant 0 : index
    %c0_0 = arith.constant 0 : index
    %0 = vector.load %arg1[%c0, %c0_0] : memref<128x32xbf16, #tpu.memory_space<vmem>>, vector<128x32xbf16>
    %c0_1 = arith.constant 0 : index
    %c0_2 = arith.constant 0 : index
    %1 = vector.load %arg2[%c0_1, %c0_2] : memref<32x96xbf16, #tpu.memory_space<vmem>>, vector<32x96xbf16>
    %cst = arith.constant dense<0.000000e+00> : vector<128x96xf32>
    %2 = tpu.matmul %0, %1, %cst {dimension_numbers = #tpu.dot_dimension_numbers<[1], [0], [0], [1], [0, 0, 1, 1], [], []>} : vector<128x32xbf16>, vector<32x96xbf16>, vector<128x96xf32> -> vector<128x96xf32>
    %3 = vector.extract_strided_slice %2 {offsets = [0, 0], sizes = [128, 64], strides = [1, 1]} : vector<128x96xf32> to vector<128x64xf32>
    %c0_3 = arith.constant 0 : index
    %c0_4 = arith.constant 0 : index
    %4 = vector.load %arg3[%c0_3, %c0_4] : memref<128x64xbf16, #tpu.memory_space<vmem>>, vector<128x64xbf16>
    %5 = arith.extf %4 : vector<128x64xbf16> to vector<128x64xf32>
    %6 = arith.mulf %3, %5 : vector<128x64xf32>
    %7 = vector.extract_strided_slice %6 {offsets = [0, 0], sizes = [128, 32], strides = [1, 1]} : vector<128x64xf32> to vector<128x32xf32>
    %8 = vector.extract_strided_slice %6 {offsets = [0, 32], sizes = [128, 32], strides = [1, 1]} : vector<128x64xf32> to vector<128x32xf32>
    %9 = arith.addf %7, %8 : vector<128x32xf32>
    %10 = vector.extract_strided_slice %2 {offsets = [0, 64], sizes = [128, 32], strides = [1, 1]} : vector<128x96xf32> to vector<128x32xf32>
    %11 = tpu.concatenate %9, %10 in 1 : vector<128x32xf32>, vector<128x32xf32> -> vector<128x64xf32>
    %12 = arith.truncf %11 : vector<128x64xf32> to vector<128x64xbf16>
    %c0_5 = arith.constant 0 : index
    %c0_6 = arith.constant 0 : index
    %13 = vector.load %arg4[%c0_5, %c0_6] : memref<128x64xbf16, #tpu.memory_space<vmem>>, vector<128x64xbf16>
    tpu.vector_store %arg4[%c0_5, %c0_6], %12 {strides = array<i32>} : memref<128x64xbf16, #tpu.memory_space<vmem>>, vector<128x64xbf16>,
    return
  }
  func.func @transform_0(%arg0: i32) -> (i32, i32) {
    %c0_i32 = arith.constant 0 : i32
    %c0_i32_0 = arith.constant 0 : i32
    return %arg0, %c0_i32 : i32, i32
  }
  func.func @transform_1(%arg0: i32) -> (i32, i32) {
    %c0_i32 = arith.constant 0 : i32
    %c0_i32_0 = arith.constant 0 : i32
    %c0_i32_1 = arith.constant 0 : i32
    return %c0_i32, %c0_i32_0 : i32, i32
  }
  func.func @transform_2(%arg0: i32) -> (i32, i32) {
    %c0_i32 = arith.constant 0 : i32
    %c0_i32_0 = arith.constant 0 : i32
    return %arg0, %c0_i32 : i32, i32
  }
  func.func @transform_3(%arg0: i32) -> (i32, i32) {
    %c0_i32 = arith.constant 0 : i32
    %c0_i32_0 = arith.constant 0 : i32
    return %arg0, %c0_i32 : i32, i32
  }
}

</mosaic_0001>

<llo_original>
// kernel: tpu_custom_call.1
$region0: #{tpu_custom_call.1}
  #allocation0 [shape = 'u32[]', space=smem, size = 0x4, offset = 0x4, fixed_abs, tag = 'smem constant byte address 0x4 - core index']
  #allocation1 [shape = 'u32[144,128]{1,0:T(1,128)}', space=vmem, size = 0x12000, scoped, tag = 'internal scratch']
  %s0 = inlined_call_operand.vmem [shape: bf16[128,32], index: 0, kind: input, shape index: {}]
  %s1 = inlined_call_operand.vmem [shape: bf16[32,96], index: 1, kind: input, shape index: {}]
  %s2 = inlined_call_operand.vmem [shape: bf16[128,64], index: 2, kind: input, shape index: {}]
  %s3 = inlined_call_operand.vmem [shape: bf16[128,64], index: 3, kind: output, shape index: {}]
  %s4 = sld [smem:[#allocation0]]
  $region22: #{tpu_custom_call.1} parent=0
    _
  %s6 = ssub.s32 1, %s4
  %s7 = scalar_select 0, %s6, %s4
  // Predicated region
  $region2: #{tpu_custom_call.1} parent=0 // pred_check
    _
  $region3: #{tpu_custom_call.1} parent=0 // pred_check_branch
    %9 = sbr.rel (0) target = $region5
  $region4: #{tpu_custom_call.1} parent=0 // pred_region
    _
  $region5: #{tpu_custom_call.1} parent=0 // pred_fallthru
    _
  // Predicated region
  $region6: #{tpu_custom_call.1} parent=0 // pred_check
    _
  $region7: #{tpu_custom_call.1} parent=0 // pred_check_branch
    %11 = sbr.rel (0) target = $region9
  $region8: #{tpu_custom_call.1} parent=0 // pred_region
    _
  $region9: #{tpu_custom_call.1} parent=0 // pred_fallthru
    _
  // Predicated region
  $region10: #{tpu_custom_call.1} parent=0 // pred_check
    _
  $region11: #{tpu_custom_call.1} parent=0 // pred_check_branch
    %13 = sbr.rel (0) target = $region13
  $region12: #{tpu_custom_call.1} parent=0 // pred_region
    _
  $region13: #{tpu_custom_call.1} parent=0 // pred_fallthru
    _
  %v15 = vld [vmem:[%s0] sm:$0xf]
  %v16 = vld [vmem:[%s0 + $0x4] sm:$0xf]
  %v17 = vld [vmem:[%s0 + $0x8] sm:$0xf]
  %v18 = vld [vmem:[%s0 + $0xc] sm:$0xf]
  %v19 = vld [vmem:[%s0 + $0x10] sm:$0xf]
  %v20 = vld [vmem:[%s0 + $0x14] sm:$0xf]
  %v21 = vld [vmem:[%s0 + $0x18] sm:$0xf]
  %v22 = vld [vmem:[%s0 + $0x1c] sm:$0xf]
  %v23 = vld [vmem:[%s0 + $0x20] sm:$0xf]
  %v24 = vld [vmem:[%s0 + $0x24] sm:$0xf]
  %v25 = vld [vmem:[%s0 + $0x28] sm:$0xf]
  %v26 = vld [vmem:[%s0 + $0x2c] sm:$0xf]
  %v27 = vld [vmem:[%s0 + $0x30] sm:$0xf]
  %v28 = vld [vmem:[%s0 + $0x34] sm:$0xf]
  %v29 = vld [vmem:[%s0 + $0x38] sm:$0xf]
  %v30 = vld [vmem:[%s0 + $0x3c] sm:$0xf]
  %v31 = vld [vmem:[%s1] sm:$0xf]
  %v32 = vld [vmem:[%s1 + $0x4] sm:$0xf]
  %v33 = vld [vmem:[%s1 + $0x8] sm:$0xf]
  %v34 = vld [vmem:[%s1 + $0xc] sm:$0xf]
  %v51 = vunpack.c.l.b16 %v15
  %v52 = vunpack.c.l.b16 %v16
  %v53 = vunpack.c.l.b16 %v17
  %v54 = vunpack.c.l.b16 %v18
  %v55 = vunpack.c.l.b16 %v19
  %v56 = vunpack.c.l.b16 %v20
  %v57 = vunpack.c.l.b16 %v21
  %v58 = vunpack.c.l.b16 %v22
  %v59 = vunpack.c.l.b16 %v23
  %v60 = vunpack.c.l.b16 %v24
  %v61 = vunpack.c.l.b16 %v25
  %v62 = vunpack.c.l.b16 %v26
  %v63 = vunpack.c.l.b16 %v27
  %v64 = vunpack.c.l.b16 %v28
  %v65 = vunpack.c.l.b16 %v29
  %v66 = vunpack.c.l.b16 %v30
  %v67 = vpack.c.b16 %v52, %v51
  %v68 = vpack.c.b16 %v54, %v53
  %v69 = vpack.c.b16 %v56, %v55
  %v70 = vpack.c.b16 %v58, %v57
  %v71 = vpack.c.b16 %v60, %v59
  %v72 = vpack.c.b16 %v62, %v61
  %v73 = vpack.c.b16 %v64, %v63
  %v74 = vpack.c.b16 %v66, %v65
  %v79 = vunpack.c.l.b16 %v31
  %v80 = vunpack.c.l.b16 %v32
  %v81 = vunpack.c.l.b16 %v33
  %v82 = vunpack.c.l.b16 %v34
  %v83 = vpack.c.b16 %v80, %v79
  %v84 = vpack.c.b16 %v82, %v81
  %vm87 = vcmask 261120
  %v89 = vsel %vm87, %v67, 0
  %v92 = vsel %vm87, %v68, 0
  %v95 = vsel %vm87, %v69, 0
  %v98 = vsel %vm87, %v70, 0
  %v101 = vsel %vm87, %v71, 0
  %v104 = vsel %vm87, %v72, 0
  %v107 = vsel %vm87, %v73, 0
  %v110 = vsel %vm87, %v74, 0
  %112 = vmatprep.subr.bf16.mxu0 0
  %113 = vmatpush1.bf16.msra.mxu0 %v83
  %114 = vmatprep.subr.bf16.mxu0 0
  %115 = vmatpush1.bf16.msra.mxu0 %v84
  %116 = vmatprep.subr.bf16.mxu0 0
  %117 = vmatpush1.bf16.msra.mxu0 0
  %118 = vmatprep.subr.bf16.mxu0 0
  %119 = vmatpush1.bf16.msra.mxu0 0
  %120 = vmatprep.subr.bf16.mxu0 0
  %121 = vmatpush1.bf16.msra.mxu0 0
  %122 = vmatprep.subr.bf16.mxu0 0
  %123 = vmatpush1.bf16.msra.mxu0 0
  %124 = vmatprep.subr.bf16.mxu0 0
  %125 = vmatpush1.bf16.msra.mxu0 0
  %126 = vmatprep.subr.bf16.mxu0 0
  %127 = vmatpush1.bf16.msra.mxu0 0
  %128 = vmatprep.subr.bf16.mxu0 0
  %129 = vmatpush1.bf16.msra.mxu0 0
  %130 = vmatprep.subr.bf16.mxu0 0
  %131 = vmatpush1.bf16.msra.mxu0 0
  %132 = vmatprep.subr.bf16.mxu0 0
  %133 = vmatpush1.bf16.msra.mxu0 0
  %134 = vmatprep.subr.bf16.mxu0 0
  %135 = vmatpush1.bf16.msra.mxu0 0
  %136 = vmatprep.subr.bf16.mxu0 0
  %137 = vmatpush1.bf16.msra.mxu0 0
  %138 = vmatprep.subr.bf16.mxu0 0
  %139 = vmatpush1.bf16.msra.mxu0 0
  %140 = vmatprep.subr.bf16.mxu0 0
  %141 = vmatpush1.bf16.msra.mxu0 0
  %142 = vmatprep.subr.bf16.mxu0 0
  %143 = vmatpush1.bf16.msra.mxu0 0
  %144 = vmatprep.mubr.bf16.mxu0 0
  %145 = vmatmul.mubr.bf16.gmra.mrb[0].mxu0 %v89
  %v146 = vpop.f32.mrb[0].mxu0
  %v147 = vadd.f32 0.0, %v146
  %v148 = vpop.f32.mrb[0].mxu0
  %v149 = vpop.f32.mrb[0].mxu0
  %v150 = vadd.f32 0.0, %v149
  %v151 = vpop.f32.mrb[0].mxu0
  %152 = vmatprep.mubr.bf16.mxu0 0
  %153 = vmatmul.mubr.bf16.gmra.mrb[0].mxu0 %v92
  %v154 = vpop.f32.mrb[0].mxu0
  %v155 = vadd.f32 0.0, %v154
  %v156 = vpop.f32.mrb[0].mxu0
  %v157 = vpop.f32.mrb[0].mxu0
  %v158 = vadd.f32 0.0, %v157
  %v159 = vpop.f32.mrb[0].mxu0
  %160 = vmatprep.mubr.bf16.mxu0 0
  %161 = vmatmul.mubr.bf16.gmra.mrb[0].mxu0 %v95
  %v162 = vpop.f32.mrb[0].mxu0
  %v163 = vadd.f32 0.0, %v162
  %v164 = vpop.f32.mrb[0].mxu0
  %v165 = vpop.f32.mrb[0].mxu0
  %v166 = vadd.f32 0.0, %v165
  %v167 = vpop.f32.mrb[0].mxu0
  %168 = vmatprep.mubr.bf16.mxu0 0
  %169 = vmatmul.mubr.bf16.gmra.mrb[0].mxu0 %v98
  %v170 = vpop.f32.mrb[0].mxu0
  %v171 = vadd.f32 0.0, %v170
  %v172 = vpop.f32.mrb[0].mxu0
  %v173 = vpop.f32.mrb[0].mxu0
  %v174 = vadd.f32 0.0, %v173
  %v175 = vpop.f32.mrb[0].mxu0
  %176 = vmatprep.mubr.bf16.mxu0 0
  %177 = vmatmul.mubr.bf16.gmra.mrb[0].mxu0 %v101
  %v178 = vpop.f32.mrb[0].mxu0
  %v179 = vadd.f32 0.0, %v178
  %v180 = vpop.f32.mrb[0].mxu0
  %v181 = vpop.f32.mrb[0].mxu0
  %v182 = vadd.f32 0.0, %v181
  %v183 = vpop.f32.mrb[0].mxu0
  %184 = vmatprep.mubr.bf16.mxu0 0
  %185 = vmatmul.mubr.bf16.gmra.mrb[0].mxu0 %v104
  %v186 = vpop.f32.mrb[0].mxu0
  %v187 = vadd.f32 0.0, %v186
  %v188 = vpop.f32.mrb[0].mxu0
  %v189 = vpop.f32.mrb[0].mxu0
  %v190 = vadd.f32 0.0, %v189
  %v191 = vpop.f32.mrb[0].mxu0
  %192 = vmatprep.mubr.bf16.mxu0 0
  %193 = vmatmul.mubr.bf16.gmra.mrb[0].mxu0 %v107
  %v194 = vpop.f32.mrb[0].mxu0
  %v195 = vadd.f32 0.0, %v194
  %v196 = vpop.f32.mrb[0].mxu0
  %v197 = vpop.f32.mrb[0].mxu0
  %v198 = vadd.f32 0.0, %v197
  %v199 = vpop.f32.mrb[0].mxu0
  %200 = vmatprep.mubr.bf16.mxu0 0
  %201 = vmatmul.mubr.bf16.gmra.mrb[0].mxu0 %v110
  %v202 = vpop.f32.mrb[0].mxu0
  %v203 = vadd.f32 0.0, %v202
  %v204 = vpop.f32.mrb[0].mxu0
  %v205 = vpop.f32.mrb[0].mxu0
  %v206 = vadd.f32 0.0, %v205
  %v207 = vpop.f32.mrb[0].mxu0
  %208 = vdwg.mxu0
  %v209 = vld [vmem:[%s2] sm:$0xf]
  %v210 = vld [vmem:[%s2 + $0x4] sm:$0xf]
  %v211 = vld [vmem:[%s2 + $0x8] sm:$0xf]
  %v212 = vld [vmem:[%s2 + $0xc] sm:$0xf]
  %v213 = vld [vmem:[%s2 + $0x10] sm:$0xf]
  %v214 = vld [vmem:[%s2 + $0x14] sm:$0xf]
  %v215 = vld [vmem:[%s2 + $0x18] sm:$0xf]
  %v216 = vld [vmem:[%s2 + $0x1c] sm:$0xf]
  %v217 = vld [vmem:[%s2 + $0x20] sm:$0xf]
  %v218 = vld [vmem:[%s2 + $0x24] sm:$0xf]
  %v219 = vld [vmem:[%s2 + $0x28] sm:$0xf]
  %v220 = vld [vmem:[%s2 + $0x2c] sm:$0xf]
  %v221 = vld [vmem:[%s2 + $0x30] sm:$0xf]
  %v222 = vld [vmem:[%s2 + $0x34] sm:$0xf]
  %v223 = vld [vmem:[%s2 + $0x38] sm:$0xf]
  %v224 = vld [vmem:[%s2 + $0x3c] sm:$0xf]
  %v225 = vunpack.c.l.bf16 %v209
  %v226 = vunpack.c.l.bf16 %v210
  %v227 = vunpack.c.l.bf16 %v211
  %v228 = vunpack.c.l.bf16 %v212
  %v229 = vunpack.c.l.bf16 %v213
  %v230 = vunpack.c.l.bf16 %v214
  %v231 = vunpack.c.l.bf16 %v215
  %v232 = vunpack.c.l.bf16 %v216
  %v233 = vunpack.c.l.bf16 %v217
  %v234 = vunpack.c.l.bf16 %v218
  %v235 = vunpack.c.l.bf16 %v219
  %v236 = vunpack.c.l.bf16 %v220
  %v237 = vunpack.c.l.bf16 %v221
  %v238 = vunpack.c.l.bf16 %v222
  %v239 = vunpack.c.l.bf16 %v223
  %v240 = vunpack.c.l.bf16 %v224
  %v241 = vmul.f32 %v147, %v225
  %v242 = vmul.f32 %v150, %v226
  %v243 = vmul.f32 %v155, %v227
  %v244 = vmul.f32 %v158, %v228
  %v245 = vmul.f32 %v163, %v229
  %v246 = vmul.f32 %v166, %v230
  %v247 = vmul.f32 %v171, %v231
  %v248 = vmul.f32 %v174, %v232
  %v249 = vmul.f32 %v179, %v233
  %v250 = vmul.f32 %v182, %v234
  %v251 = vmul.f32 %v187, %v235
  %v252 = vmul.f32 %v190, %v236
  %v253 = vmul.f32 %v195, %v237
  %v254 = vmul.f32 %v198, %v238
  %v255 = vmul.f32 %v203, %v239
  %v256 = vmul.f32 %v206, %v240
  %273 = vrot.lane.b32.xlu0 %v241, 96
  %v274 = vpop.permute.xlu0 %273
  %275 = vrot.lane.b32.xlu0 %v242, 96
  %v276 = vpop.permute.xlu0 %275
  %277 = vrot.lane.b32.xlu0 %v243, 96
  %v278 = vpop.permute.xlu0 %277
  %279 = vrot.lane.b32.xlu0 %v244, 96
  %v280 = vpop.permute.xlu0 %279
  %281 = vrot.lane.b32.xlu0 %v245, 96
  %v282 = vpop.permute.xlu0 %281
  %283 = vrot.lane.b32.xlu0 %v246, 96
  %v284 = vpop.permute.xlu0 %283
  %285 = vrot.lane.b32.xlu0 %v247, 96
  %v286 = vpop.permute.xlu0 %285
  %287 = vrot.lane.b32.xlu0 %v248, 96
  %v288 = vpop.permute.xlu0 %287
  %289 = vrot.lane.b32.xlu0 %v249, 96
  %v290 = vpop.permute.xlu0 %289
  %291 = vrot.lane.b32.xlu0 %v250, 96
  %v292 = vpop.permute.xlu0 %291
  %293 = vrot.lane.b32.xlu0 %v251, 96
  %v294 = vpop.permute.xlu0 %293
  %295 = vrot.lane.b32.xlu0 %v252, 96
  %v296 = vpop.permute.xlu0 %295
  %297 = vrot.lane.b32.xlu0 %v253, 96
  %v298 = vpop.permute.xlu0 %297
  %299 = vrot.lane.b32.xlu0 %v254, 96
  %v300 = vpop.permute.xlu0 %299
  %301 = vrot.lane.b32.xlu0 %v255, 96
  %v302 = vpop.permute.xlu0 %301
  %303 = vrot.lane.b32.xlu0 %v256, 96
  %v304 = vpop.permute.xlu0 %303
  %v321 = vadd.f32 %v241, %v274
  %v322 = vadd.f32 %v242, %v276
  %v323 = vadd.f32 %v243, %v278
  %v324 = vadd.f32 %v244, %v280
  %v325 = vadd.f32 %v245, %v282
  %v326 = vadd.f32 %v246, %v284
  %v327 = vadd.f32 %v247, %v286
  %v328 = vadd.f32 %v248, %v288
  %v329 = vadd.f32 %v249, %v290
  %v330 = vadd.f32 %v250, %v292
  %v331 = vadd.f32 %v251, %v294
  %v332 = vadd.f32 %v252, %v296
  %v333 = vadd.f32 %v253, %v298
  %v334 = vadd.f32 %v254, %v300
  %v335 = vadd.f32 %v255, %v302
  %v336 = vadd.f32 %v256, %v304
  %353 = vrot.lane.b32.xlu0 %v147, 96
  %v354 = vpop.permute.xlu0 %353
  %355 = vrot.lane.b32.xlu0 %v150, 96
  %v356 = vpop.permute.xlu0 %355
  %357 = vrot.lane.b32.xlu0 %v155, 96
  %v358 = vpop.permute.xlu0 %357
  %359 = vrot.lane.b32.xlu0 %v158, 96
  %v360 = vpop.permute.xlu0 %359
  %361 = vrot.lane.b32.xlu0 %v163, 96
  %v362 = vpop.permute.xlu0 %361
  %363 = vrot.lane.b32.xlu0 %v166, 96
  %v364 = vpop.permute.xlu0 %363
  %365 = vrot.lane.b32.xlu0 %v171, 96
  %v366 = vpop.permute.xlu0 %365
  %367 = vrot.lane.b32.xlu0 %v174, 96
  %v368 = vpop.permute.xlu0 %367
  %369 = vrot.lane.b32.xlu0 %v179, 96
  %v370 = vpop.permute.xlu0 %369
  %371 = vrot.lane.b32.xlu0 %v182, 96
  %v372 = vpop.permute.xlu0 %371
  %373 = vrot.lane.b32.xlu0 %v187, 96
  %v374 = vpop.permute.xlu0 %373
  %375 = vrot.lane.b32.xlu0 %v190, 96
  %v376 = vpop.permute.xlu0 %375
  %377 = vrot.lane.b32.xlu0 %v195, 96
  %v378 = vpop.permute.xlu0 %377
  %379 = vrot.lane.b32.xlu0 %v198, 96
  %v380 = vpop.permute.xlu0 %379
  %381 = vrot.lane.b32.xlu0 %v203, 96
  %v382 = vpop.permute.xlu0 %381
  %383 = vrot.lane.b32.xlu0 %v206, 96
  %v384 = vpop.permute.xlu0 %383
  %v401 = vsel %vm87, %v321, %v354
  %v402 = vsel %vm87, %v322, %v356
  %v403 = vsel %vm87, %v323, %v358
  %v404 = vsel %vm87, %v324, %v360
  %v405 = vsel %vm87, %v325, %v362
  %v406 = vsel %vm87, %v326, %v364
  %v407 = vsel %vm87, %v327, %v366
  %v408 = vsel %vm87, %v328, %v368
  %v409 = vsel %vm87, %v329, %v370
  %v410 = vsel %vm87, %v330, %v372
  %v411 = vsel %vm87, %v331, %v374
  %v412 = vsel %vm87, %v332, %v376
  %v413 = vsel %vm87, %v333, %v378
  %v414 = vsel %vm87, %v334, %v380
  %v415 = vsel %vm87, %v335, %v382
  %v416 = vsel %vm87, %v336, %v384
  %v417 = vpack.c.bf16 %v402, %v401
  %v418 = vpack.c.bf16 %v404, %v403
  %v419 = vpack.c.bf16 %v406, %v405
  %v420 = vpack.c.bf16 %v408, %v407
  %v421 = vpack.c.bf16 %v410, %v409
  %v422 = vpack.c.bf16 %v412, %v411
  %v423 = vpack.c.bf16 %v414, %v413
  %v424 = vpack.c.bf16 %v416, %v415
  %v433 = vunpack.c.l.b16 %v417
  %v434 = vunpack.c.h.b16 %v417
  %v435 = vunpack.c.l.b16 %v418
  %v436 = vunpack.c.h.b16 %v418
  %v437 = vunpack.c.l.b16 %v419
  %v438 = vunpack.c.h.b16 %v419
  %v439 = vunpack.c.l.b16 %v420
  %v440 = vunpack.c.h.b16 %v420
  %v441 = vunpack.c.l.b16 %v421
  %v442 = vunpack.c.h.b16 %v421
  %v443 = vunpack.c.l.b16 %v422
  %v444 = vunpack.c.h.b16 %v422
  %v445 = vunpack.c.l.b16 %v423
  %v446 = vunpack.c.h.b16 %v423
  %v447 = vunpack.c.l.b16 %v424
  %v448 = vunpack.c.h.b16 %v424
  %v449 = vpack.c.b16 %v433, %v433
  %v450 = vpack.c.b16 %v434, %v434
  %v451 = vpack.c.b16 %v435, %v435
  %v452 = vpack.c.b16 %v436, %v436
  %v453 = vpack.c.b16 %v437, %v437
  %v454 = vpack.c.b16 %v438, %v438
  %v455 = vpack.c.b16 %v439, %v439
  %v456 = vpack.c.b16 %v440, %v440
  %v457 = vpack.c.b16 %v441, %v441
  %v458 = vpack.c.b16 %v442, %v442
  %v459 = vpack.c.b16 %v443, %v443
  %v460 = vpack.c.b16 %v444, %v444
  %v461 = vpack.c.b16 %v445, %v445
  %v462 = vpack.c.b16 %v446, %v446
  %v463 = vpack.c.b16 %v447, %v447
  %v464 = vpack.c.b16 %v448, %v448
  %vm481 = vcmask 519168
  %482 = vst.msk [vmem:[%s3] sm:$0xf] %vm481, %v449
  %483 = vst.msk [vmem:[%s3 + $0x4] sm:$0xf] %vm481, %v450
  %484 = vst.msk [vmem:[%s3 + $0x8] sm:$0xf] %vm481, %v451
  %485 = vst.msk [vmem:[%s3 + $0xc] sm:$0xf] %vm481, %v452
  %486 = vst.msk [vmem:[%s3 + $0x10] sm:$0xf] %vm481, %v453
  %487 = vst.msk [vmem:[%s3 + $0x14] sm:$0xf] %vm481, %v454
  %488 = vst.msk [vmem:[%s3 + $0x18] sm:$0xf] %vm481, %v455
  %489 = vst.msk [vmem:[%s3 + $0x1c] sm:$0xf] %vm481, %v456
  %490 = vst.msk [vmem:[%s3 + $0x20] sm:$0xf] %vm481, %v457
  %491 = vst.msk [vmem:[%s3 + $0x24] sm:$0xf] %vm481, %v458
  %492 = vst.msk [vmem:[%s3 + $0x28] sm:$0xf] %vm481, %v459
  %493 = vst.msk [vmem:[%s3 + $0x2c] sm:$0xf] %vm481, %v460
  %494 = vst.msk [vmem:[%s3 + $0x30] sm:$0xf] %vm481, %v461
  %495 = vst.msk [vmem:[%s3 + $0x34] sm:$0xf] %vm481, %v462
  %496 = vst.msk [vmem:[%s3 + $0x38] sm:$0xf] %vm481, %v463
  %497 = vst.msk [vmem:[%s3 + $0x3c] sm:$0xf] %vm481, %v464
  // Predicated region
  $region14: #{tpu_custom_call.1} parent=0 // pred_check
    _
  $region15: #{tpu_custom_call.1} parent=0 // pred_check_branch
    %499 = sbr.rel (0) target = $region17
  $region16: #{tpu_custom_call.1} parent=0 // pred_region
    _
  $region17: #{tpu_custom_call.1} parent=0 // pred_fallthru
    _
  // Predicated region
  $region18: #{tpu_custom_call.1} parent=0 // pred_check
    _
  $region19: #{tpu_custom_call.1} parent=0 // pred_check_branch
    %501 = sbr.rel (0) target = $region21
  $region20: #{tpu_custom_call.1} parent=0 // pred_region
    _
  $region21: #{tpu_custom_call.1} parent=0 // pred_fallthru
    _

</llo_original>
